<compile_context>
chip_gen: v7x
topology: tpu7x:2x2x1
jax: 0.10.0
libtpu: 0.0.40
codegen_flags: <defaults>
</compile_context>

<pallas_src>
import jax
import jax.numpy as jnp
from jax.experimental import pallas as pl
from jax.experimental.pallas import tpu as pltpu


# ------------------------------ tiling helper ------------------------------ #
def _pick_tile_n(n, row_bytes, budget_bytes=4 << 20):
    """Largest power-of-two tile dividing n whose tile fits the VMEM budget."""
    for t in (1024, 512, 256, 128, 64, 32, 16, 8):
        if n % t == 0 and t * row_bytes <= budget_bytes:
            return t
    return n  # fall back to a single full block (small / odd n)


# ----------------------------- cross entropy ------------------------------- #
def _cross_entropy_kernel(logits_ref, labels_ref, partial_ref):
    """Per-tile partial sum of (logsumexp(row) - logit[row, label])."""
    logits = logits_ref[...].astype(jnp.float32)            # (TILE_N, C)
    labels = labels_ref[...]                                 # (TILE_N, 1) int32
    tn, c = logits.shape
    m = jnp.max(logits, axis=-1, keepdims=True)
    lse = jnp.log(jnp.sum(jnp.exp(logits - m), axis=-1, keepdims=True)) + m
    cols = jax.lax.broadcasted_iota(jnp.int32, (tn, c), 1)
    onehot = (cols == labels).astype(jnp.float32)
    picked = jnp.sum(onehot * logits, axis=-1, keepdims=True)
    partial_ref[0, 0] = jnp.sum(lse - picked)


def cross_entropy_pallas(logits, labels):
    n, c = logits.shape
    tile_n = _pick_tile_n(n, c * logits.dtype.itemsize)
    gn = n // tile_n
    labels2d = labels.astype(jnp.int32).reshape(n, 1)
    partials = pl.pallas_call(
        _cross_entropy_kernel,
        out_shape=jax.ShapeDtypeStruct((gn, 1), jnp.float32),
        grid=(gn,),
        in_specs=[
            pl.BlockSpec((tile_n, c), lambda i: (i, 0)),
            pl.BlockSpec((tile_n, 1), lambda i: (i, 0)),
        ],
        out_specs=pl.BlockSpec((1, 1), lambda i: (i, 0),
                               memory_space=pltpu.MemorySpace.SMEM),
        compiler_params=pltpu.CompilerParams(
            dimension_semantics=("parallel",)),
    )(logits, labels2d)
    return jnp.sum(partials) / n


# ------------------------------ attn KL div -------------------------------- #
def _make_pool(s, t):
    """(S, T) 0/1 projector: pool[p, i] = 1 iff p // (S//T) == i."""
    factor = s // t
    return (jnp.arange(s)[:, None] // factor ==
            jnp.arange(t)[None, :]).astype(jnp.float32)


def _kl_partial_sum(x, t, pool):
    """sum over one item of xlogy(marg, marg) - marg * log(t); marg = sum-pool(x)."""
    # sum-pool via two small MXU matmuls:  marg = pool^T @ x @ pool
    step1 = jax.lax.dot_general(x, pool, (((1,), (0,)), ((), ())),
                                preferred_element_type=jnp.float32)   # (S, T)
    marg = jax.lax.dot_general(pool, step1, (((0,), (0,)), ((), ())),
                               preferred_element_type=jnp.float32)    # (T, T)
    pos = marg > 0.0
    safe = jnp.where(pos, marg, 1.0)
    # xlogy(m, m) - m*log(t) == m * log(m / t) for m > 0, else 0
    # (precondition: t > 0, e.g. softmax targets) -- one log + one reciprocal.
    term = jnp.where(pos,
                     marg * jnp.log(safe * pl.reciprocal(t, approx=False)),
                     0.0)
    return jnp.sum(term)


def _attn_kl_kernel(inp_ref, tgt_ref, pool_ref, partial_ref):
    x = inp_ref[0].astype(jnp.float32)          # (S, S)
    t = tgt_ref[0].astype(jnp.float32)          # (T, T)
    partial_ref[0, 0] = _kl_partial_sum(x, t, pool_ref[...])


def attn_kl_div_pallas(inp, tgt, detach_target=False):
    assert inp.ndim == 3 and tgt.ndim == 3, "Expected 3D tensors"
    assert inp.shape[-1] == inp.shape[-2] and tgt.shape[-1] == tgt.shape[-2]
    assert inp.shape[-1] > tgt.shape[-1]
    b, s, _ = inp.shape
    ts = tgt.shape[-1]
    if detach_target:
        tgt = jax.lax.stop_gradient(tgt)        # forward no-op
    pool = _make_pool(s, ts)
    partials = pl.pallas_call(
        _attn_kl_kernel,
        out_shape=jax.ShapeDtypeStruct((b, 1), jnp.float32),
        grid=(b,),
        in_specs=[
            pl.BlockSpec((1, s, s), lambda i: (i, 0, 0)),
            pl.BlockSpec((1, ts, ts), lambda i: (i, 0, 0)),
            pl.BlockSpec((s, ts), lambda i: (0, 0)),
        ],
        out_specs=pl.BlockSpec((1, 1), lambda i: (i, 0),
                               memory_space=pltpu.MemorySpace.SMEM),
        compiler_params=pltpu.CompilerParams(
            dimension_semantics=("parallel",)),
    )(inp, tgt, pool)
    return jnp.sum(partials) / b


# ---- fused 3-attn path: kl(a->b) and kl(b->c) in one kernel (b read once) -- #
def _attn_kl_pair_kernel(a_ref, b_ref, c_ref, pool_ab_ref, pool_bc_ref,
                         pab_ref, pbc_ref):
    a = a_ref[0].astype(jnp.float32)
    bm = b_ref[0].astype(jnp.float32)
    cm = c_ref[0].astype(jnp.float32)
    pab_ref[0, 0] = _kl_partial_sum(a, bm, pool_ab_ref[...])
    pbc_ref[0, 0] = _kl_partial_sum(bm, cm, pool_bc_ref[...])


def attn_kl_div_pair_pallas(a, bm, cm, detach_targets=False):
    assert a.ndim == 3 and bm.ndim == 3 and cm.ndim == 3
    b = a.shape[0]
    sa, sb, sc = a.shape[-1], bm.shape[-1], cm.shape[-1]
    assert a.shape[-1] == a.shape[-2] and bm.shape[-1] == bm.shape[-2]
    assert cm.shape[-1] == cm.shape[-2]
    assert sa > sb > sc
    if detach_targets:
        # Forward no-op. NOTE: bm plays both input (kl(bm,cm)) and target
        # (kl(a,bm)) roles; the role-split matters only for a future backward.
        cm = jax.lax.stop_gradient(cm)
    pool_ab = _make_pool(sa, sb)
    pool_bc = _make_pool(sb, sc)
    scalar_out = pl.BlockSpec((1, 1), lambda i: (i, 0),
                              memory_space=pltpu.MemorySpace.SMEM)
    pab, pbc = pl.pallas_call(
        _attn_kl_pair_kernel,
        out_shape=(jax.ShapeDtypeStruct((b, 1), jnp.float32),
                   jax.ShapeDtypeStruct((b, 1), jnp.float32)),
        grid=(b,),
        in_specs=[
            pl.BlockSpec((1, sa, sa), lambda i: (i, 0, 0)),
            pl.BlockSpec((1, sb, sb), lambda i: (i, 0, 0)),
            pl.BlockSpec((1, sc, sc), lambda i: (i, 0, 0)),
            pl.BlockSpec((sa, sb), lambda i: (0, 0)),
            pl.BlockSpec((sb, sc), lambda i: (0, 0)),
        ],
        out_specs=(scalar_out, scalar_out),
        compiler_params=pltpu.CompilerParams(
            dimension_semantics=("parallel",)),
    )(a, bm, cm, pool_ab, pool_bc)
    return jnp.sum(pab) / b, jnp.sum(pbc) / b


# ------------------------------ module wrapper ------------------------------ #
class TauKLDivLossPallas:
    def __init__(self, attn_kl=True, kl_weight=0.0001, detach_targets=False):
        self.attn_kl = attn_kl
        self.kl_weight = kl_weight
        self.detach_targets = detach_targets

    def __call__(self, output, targets, attn):
        ce = cross_entropy_pallas(output, targets)
        if self.attn_kl and attn is not None:
            if len(attn) == 2:
                tau3, tau4 = attn
                kl = attn_kl_div_pallas(tau3, tau4, self.detach_targets)
                total = ce + self.kl_weight * kl
                return (ce, kl, total)
            elif len(attn) == 3:
                tau2, tau3, tau4 = attn
                kl23, kl34 = attn_kl_div_pair_pallas(
                    tau2, tau3, tau4, self.detach_targets)
                total = ce + self.kl_weight * (kl23 + kl34)
                return (ce, (kl23, kl34, None), total)
            else:
                raise NotImplementedError
        return (ce,)


# --------------------------------- main ------------------------------------ #
def _ref_cross_entropy(logits, labels):
    lse = jax.scipy.special.logsumexp(logits, axis=-1)
    picked = jnp.take_along_axis(logits, labels[:, None], axis=-1)[:, 0]
    return jnp.mean(lse - picked)


def _ref_attn_kl(x, t):
    b, s, _ = x.shape
    tt = t.shape[-1]
    f = s // tt
    marg = x.reshape(b, tt, f, tt, f).sum(axis=(2, 4))
    xlogx = jnp.where(marg > 0, marg * jnp.log(jnp.where(marg > 0, marg, 1.0)), 0.0)
    return jnp.sum(xlogx - marg * jnp.log(t)) / b


if __name__ == "__main__":
    key = jax.random.PRNGKey(0)
    k1, k2, k3, k4, k5 = jax.random.split(key, 5)

    N, C = 8, 32            # classifier logits / labels
    B, S2, S3, S4 = 2, 32, 16, 8  # attention maps (coarse -> fine, factor 2)

    output = jax.random.normal(k1, (N, C), dtype=jnp.float32)
    targets = jax.random.randint(k2, (N,), 0, C, dtype=jnp.int32)
    tau2 = jax.nn.softmax(jax.random.normal(k5, (B, S2, S2), dtype=jnp.float32), axis=-1)
    tau3 = jax.nn.softmax(jax.random.normal(k3, (B, S3, S3), dtype=jnp.float32), axis=-1)
    tau4 = jax.nn.softmax(jax.random.normal(k4, (B, S4, S4), dtype=jnp.float32), axis=-1)

    loss_mod = TauKLDivLossPallas(attn_kl=True, kl_weight=0.0001, detach_targets=False)

    # ---- 2-attention path ----
    ce, kl, total = loss_mod(output, targets, (tau3, tau4))
    jax.block_until_ready(total)

    ce_ref = _ref_cross_entropy(output, targets)
    kl_ref = _ref_attn_kl(tau3, tau4)
    total_ref = ce_ref + 0.0001 * kl_ref
    assert jnp.allclose(ce, ce_ref, rtol=1e-4, atol=1e-5), (ce, ce_ref)
    assert jnp.allclose(kl, kl_ref, rtol=1e-4, atol=1e-5), (kl, kl_ref)
    assert jnp.allclose(total, total_ref, rtol=1e-4, atol=1e-5), (total, total_ref)

    # ---- 3-attention (fused KL pair) path ----
    ce3, (kl23, kl34, _), total3 = loss_mod(output, targets, (tau2, tau3, tau4))
    jax.block_until_ready(total3)

    kl23_ref = _ref_attn_kl(tau2, tau3)
    kl34_ref = _ref_attn_kl(tau3, tau4)
    total3_ref = ce_ref + 0.0001 * (kl23_ref + kl34_ref)
    assert jnp.allclose(kl23, kl23_ref, rtol=1e-4, atol=1e-5), (kl23, kl23_ref)
    assert jnp.allclose(kl34, kl34_ref, rtol=1e-4, atol=1e-5), (kl34, kl34_ref)
    assert jnp.allclose(total3, total3_ref, rtol=1e-4, atol=1e-5), (total3, total3_ref)

    print("KERNEL_OK")
</pallas_src>

<mosaic_0001>
module attributes {stable_mosaic.version = 11 : i64} {
  func.func @_cross_entropy_kernel(%arg0: i32, %arg1: memref<8x32xf32, #tpu.memory_space<vmem>>, %arg2: memref<8x1xi32, #tpu.memory_space<vmem>>, %arg3: memref<1x1xf32, #tpu.memory_space<smem>>) attributes {dimension_semantics = [#tpu.dimension_semantics<parallel>], iteration_bounds = array<i64: 1>, scalar_prefetch = 0 : i64, scratch_operands = 0 : i64, tpu.core_type = #tpu.core_type<tc>, window_params = [{transform_indices = @transform_0, window_bounds = array<i64: 8, 32>}, {transform_indices = @transform_1, window_bounds = array<i64: 8, 1>}, {transform_indices = @transform_2, window_bounds = array<i64: 1, 1>}]} {
    %c0 = arith.constant 0 : index
    %c0_0 = arith.constant 0 : index
    %0 = vector.load %arg1[%c0, %c0_0] : memref<8x32xf32, #tpu.memory_space<vmem>>, vector<8x32xf32>
    %c0_1 = arith.constant 0 : index
    %c0_2 = arith.constant 0 : index
    %1 = vector.load %arg2[%c0_1, %c0_2] : memref<8x1xi32, #tpu.memory_space<vmem>>, vector<8x1xi32>
    %cst = arith.constant dense<0xFF800000> : vector<8xf32>
    %2 = vector.multi_reduction <maximumf>, %0, %cst [1] : vector<8x32xf32> to vector<8xf32>
    %3 = vector.shape_cast %2 : vector<8xf32> to vector<8x1xf32>
    %4 = vector.broadcast %3 : vector<8x1xf32> to vector<8x32xf32>
    %5 = arith.subf %0, %4 : vector<8x32xf32>
    %6 = math.exp %5 : vector<8x32xf32>
    %cst_3 = arith.constant dense<0.000000e+00> : vector<8xf32>
    %7 = vector.multi_reduction <add>, %6, %cst_3 [1] : vector<8x32xf32> to vector<8xf32>
    %8 = vector.shape_cast %7 : vector<8xf32> to vector<8x1xf32>
    %9 = math.log %8 : vector<8x1xf32>
    %10 = arith.addf %9, %3 : vector<8x1xf32>
    %11 = tpu.iota {dimensions = array<i32: 1>} : vector<8x32xi32>
    %12 = vector.broadcast %1 : vector<8x1xi32> to vector<8x32xi32>
    %13 = arith.cmpi eq, %11, %12 : vector<8x32xi32>
    %14 = arith.extui %13 : vector<8x32xi1> to vector<8x32xi32>
    %15 = arith.sitofp %14 : vector<8x32xi32> to vector<8x32xf32>
    %16 = arith.mulf %15, %0 : vector<8x32xf32>
    %cst_4 = arith.constant dense<0.000000e+00> : vector<8xf32>
    %17 = vector.multi_reduction <add>, %16, %cst_4 [1] : vector<8x32xf32> to vector<8xf32>
    %18 = vector.shape_cast %17 : vector<8xf32> to vector<8x1xf32>
    %19 = arith.subf %10, %18 : vector<8x1xf32>
    %20 = vector.shape_cast %19 : vector<8x1xf32> to vector<1x8x1xf32>
    %cst_5 = arith.constant dense<0.000000e+00> : vector<1xf32>
    %21 = vector.multi_reduction <add>, %20, %cst_5 [1, 2] : vector<1x8x1xf32> to vector<1xf32>
    %22 = vector.shape_cast %21 : vector<1xf32> to vector<1x1x1xf32>
    %23 = vector.extract %22[0, 0, 0] : f32 from vector<1x1x1xf32>
    %c0_6 = arith.constant 0 : index
    %c0_7 = arith.constant 0 : index
    %24 = memref.load %arg3[%c0_6, %c0_7] : memref<1x1xf32, #tpu.memory_space<smem>>
    memref.store %23, %arg3[%c0_6, %c0_7] : memref<1x1xf32, #tpu.memory_space<smem>>
    return
  }
  func.func @transform_0(%arg0: i32) -> (i32, i32) {
    %c0_i32 = arith.constant 0 : i32
    %c0_i32_0 = arith.constant 0 : i32
    return %arg0, %c0_i32 : i32, i32
  }
  func.func @transform_1(%arg0: i32) -> (i32, i32) {
    %c0_i32 = arith.constant 0 : i32
    %c0_i32_0 = arith.constant 0 : i32
    return %arg0, %c0_i32 : i32, i32
  }
  func.func @transform_2(%arg0: i32) -> (i32, i32) {
    %c0_i32 = arith.constant 0 : i32
    %c0_i32_0 = arith.constant 0 : i32
    return %arg0, %c0_i32 : i32, i32
  }
}

</mosaic_0001>

<llo_original>
// kernel: tpu_custom_call.1
$region0: #{tpu_custom_call.1}
  #allocation0 [shape = 'u32[]', space=smem, size = 0x4, offset = 0x4, fixed_abs, tag = 'smem constant byte address 0x4 - core index']
  #allocation1 [shape = 'u32[144,128]{1,0:T(1,128)}', space=vmem, size = 0x12000, scoped, tag = 'internal scratch']
  %s0 = inlined_call_operand.vmem [shape: f32[8,32], index: 0, kind: input, shape index: {}]
  %s1 = inlined_call_operand.vmem [shape: s32[8,1], index: 1, kind: input, shape index: {}]
  %s2 = inlined_call_operand.hbm [shape: f32[1,1], index: 2, kind: output, shape index: {}]
  %s3 = sld [smem:[#allocation0]]
  $region18: #{tpu_custom_call.1} parent=0
    _
  %s5 = ssub.s32 1, %s3
  %s6 = scalar_select 0, %s5, %s3
  $region1: #{tpu_custom_call.1} parent=0
    #allocation2 [shape = 'u8[512]{0}', space=smem, size = 0x200, scoped, tag = 'output window, operand 0, single buffered']
    #allocation3 [shape = 's32[1]{0}', space=sflag, size = 0x4, scoped, tag = 'scoped memory for tpu_custom_call.1']
    %7 = vsyncpa [#allocation3], 0
    // Predicated region
    $region2: #{tpu_custom_call.1} parent=1 // pred_check
      _
    $region3: #{tpu_custom_call.1} parent=1 // pred_check_branch
      %9 = sbr.rel (0) target = $region5
    $region4: #{tpu_custom_call.1} parent=1 // pred_region
      _
    $region5: #{tpu_custom_call.1} parent=1 // pred_fallthru
      _
    // Predicated region
    $region6: #{tpu_custom_call.1} parent=1 // pred_check
      _
    $region7: #{tpu_custom_call.1} parent=1 // pred_check_branch
      %11 = sbr.rel (0) target = $region9
    $region8: #{tpu_custom_call.1} parent=1 // pred_region
      _
    $region9: #{tpu_custom_call.1} parent=1 // pred_fallthru
      _
    %v12 = vld [vmem:[%s0] sm:$0xff]
    %v13 = vld [vmem:[%s1] sm:$0xff]
    %vm14 = vcmask 261120
    %v15 = vsel %vm14, %v12, -inf
    %16 = vmax.xlane.f32.xlu0 %v15
    %v17 = vpop.xlane.xlu0 %16
    %v18 = vsub.f32 %v12, %v17
    %v19 = vmul.f32 %v18, 1.442695
    %v20 = vpow.pop %v19
    %v21 = vsel %vm14, %v20, 0.0
    %22 = vadd.xlane.f32.xlu0 %v21
    %v23 = vpop.xlane.xlu0 %22
    %v24 = vlog2.pop %v23
    %v25 = vmul.f32 %v24, 0.6931472
    %v26 = vadd.f32 %v25, %v17
    %v27 = vlaneseq
    %v28 = vand.u32 %v27, 127
    %29 = vset.pattern.permute.xlu0 0
    %30 = vperm.xlu0 %29, %v13
    %v31 = vpop.permute.xlu0 %30
    %vm32 = vcmp.eq.s32.totalorder %v28, %v31
    %v33 = vsel %vm32, 1, 0
    %v34 = vcvt.s32.f32 %v33
    %v35 = vmul.f32 %v34, %v12
    %v36 = vsel %vm14, %v35, 0.0
    %37 = vadd.xlane.f32.xlu0 %v36
    %v38 = vpop.xlane.xlu0 %37
    %v39 = vsub.f32 %v26, %v38
    %vm40 = vcmask 7168
    %v41 = vsel %vm40, %v39, 0.0
    %42 = vadd.xlane.f32.xlu0 %v41
    %v43 = vpop.xlane.xlu0 %42
    %v44 = vrot.slane %v43, 4
    %v45 = vadd.f32 %v43, %v44
    %v46 = vrot.slane %v45, 2
    %v47 = vadd.f32 %v45, %v46
    %v48 = vrot.slane %v47, 1
    %v49 = vadd.f32 %v47, %v48
    %s50 = vtos %v49
    %s51 = scalar_lea.smem [#allocation2], 0
    %52 = sst [smem:[%s51]] %s50
    // Predicated region
    $region10: #{tpu_custom_call.1} parent=1 // pred_check
      _
    $region11: #{tpu_custom_call.1} parent=1 // pred_check_branch
      %54 = sbr.rel (0) target = $region13
    $region12: #{tpu_custom_call.1} parent=1 // pred_region
      %s56 = ssub.s32 16, 16
      %57 = vsyncadd [#allocation3], %s56
      %60 = dma.smem_to_hbm [#allocation2], 16, %s2, [#allocation3]
    $region13: #{tpu_custom_call.1} parent=1 // pred_fallthru
      _
    // Predicated region
    $region14: #{tpu_custom_call.1} parent=1 // pred_check
      _
    $region15: #{tpu_custom_call.1} parent=1 // pred_check_branch
      %62 = sbr.rel (0) target = $region17
    $region16: #{tpu_custom_call.1} parent=1 // pred_region
      %63 = dma.done [#allocation3], 16
    $region17: #{tpu_custom_call.1} parent=1 // pred_fallthru
      _
    %64 = sfence
    %65 = vsyncpa [#allocation3], 1

</llo_original>
